<compile_context>
chip_gen: v5e
topology: v5e:2x2
jax: 0.10.0
libtpu: 0.0.40
codegen_flags: <defaults>
</compile_context>

<pallas_src>
import math

import jax
import jax.numpy as jnp
from jax.experimental import pallas as pl
from jax.experimental.pallas import tpu as pltpu

# ----------------------------- config (toy sizes) -----------------------------
BATCH = 2
SEQ = 8
HIDDEN = 32
NUM_HEADS = 4
NUM_KV_HEADS = 2
HEAD_DIM = HIDDEN // NUM_HEADS            # 8
N_REP = NUM_HEADS // NUM_KV_HEADS         # 2
INTERMEDIATE = 64
MAX_POS = 2048
ROPE_BASE = 10000.0
RMS_EPS = 1e-6
MASK_NEG = -1e9

M_ROWS = BATCH * SEQ                      # 16 tokens handled in one grid step
Q_WIDTH = NUM_HEADS * HEAD_DIM            # 32 (also the replicated k / v width)
QK_WIDTH = 2 * Q_WIDTH                    # 64  [q | k_rep]
ROPE_WIDTH = 2 * QK_WIDTH                 # 128 [cos | sin]  (lane-dense)

# fused weight-slab column offsets:
#   [ q|k_rep (64) | rot(q)|rot(k_rep) (64) | v_rep (32) | o (32) | gate (64) | up (64) ]
W_COL_QKR = 0
W_COL_V = 2 * QK_WIDTH                    # 128
W_COL_O = W_COL_V + Q_WIDTH               # 160
W_COL_G = W_COL_O + HIDDEN                # 192
W_COL_U = W_COL_G + INTERMEDIATE          # 256
W_COLS = W_COL_U + INTERMEDIATE           # 320


# ------------------------------- Pallas kernel --------------------------------
def decoder_layer_kernel(x_ref, rope_ref, norm_ref, consts_ref, amask_ref,
                         w_ref, wd_ref, out_ref):
    """One grid step computes the whole decoder layer for all B*S tokens."""
    x = x_ref[...]                                            # (M, H) f32

    def rmsnorm(h, w):
        var = jnp.mean(h * h, axis=-1, keepdims=True)
        return w * (h * jax.lax.rsqrt(var + RMS_EPS))

    # ---------------- attention block ----------------
    h1 = rmsnorm(x, norm_ref[0:1, :]).astype(jnp.bfloat16)

    # Fused projections (bf16 MXU operands, f32 accumulation).  GQA repeat_kv,
    # the rotate_half map and the 1/sqrt(head_dim) scale are pre-folded into
    # the weight columns, so no per-head slicing / rotation / scaling happens
    # in-kernel.
    qkr = jnp.dot(h1, w_ref[:, W_COL_QKR:W_COL_V],
                  preferred_element_type=jnp.float32)         # (M, 128)
    v_rep = jnp.dot(h1, w_ref[:, W_COL_V:W_COL_O],
                    preferred_element_type=jnp.float32)       # (M, 32)

    # RoPE: [q|k]*cos + [rot(q)|rot(k)]*sin as one elementwise mul + halved add.
    prod = qkr * rope_ref[...]                                # (M, 128) f32
    qk = prod[:, :QK_WIDTH] + prod[:, QK_WIDTH:]              # (M, 64)
    q_emb = qk[:, :Q_WIDTH]                                   # (M, 32), pre-scaled
    k_emb = qk[:, Q_WIDTH:]                                   # (M, 32), replicated

    # present (k, v) cache slab (post-RoPE k, raw v); wrapper dedups/reshapes.
    out_ref[:, HIDDEN:HIDDEN + Q_WIDTH] = k_emb
    out_ref[:, HIDDEN + Q_WIDTH:HIDDEN + 2 * Q_WIDTH] = v_rep

    # Loop-free GQA attention over all batches & heads at once.  Block-diagonal
    # key/value operands are built with one constant replication matmul + one
    # 0/1 head-mask multiply each (constants are kernel inputs, not rebuilt).
    arep = consts_ref[:, :M_ROWS]                             # (nH*M, M)
    hmask = consts_ref[:, M_ROWS:]                            # (nH*M, H)
    k_bd = jnp.dot(arep, k_emb, preferred_element_type=jnp.float32) * hmask
    v_bd = jnp.dot(arep, v_rep, preferred_element_type=jnp.float32) * hmask

    s = jnp.dot(q_emb, k_bd.T, preferred_element_type=jnp.float32)  # (M, nH*M)
    s = s + amask_ref[...]                   # causal + cross-batch additive mask
    m = jnp.max(s, axis=-1, keepdims=True)   # row max (uniform per head segment)
    e = jnp.exp(s - m)                       # masked columns underflow to 0.0
    o_num = jnp.dot(e, v_bd, preferred_element_type=jnp.float32)    # (M, H)
    o_den = jnp.dot(e, hmask, preferred_element_type=jnp.float32)   # per-head denom
    attn = o_num / o_den                     # exact softmax normalization

    attn = jnp.dot(attn.astype(jnp.bfloat16), w_ref[:, W_COL_O:W_COL_G],
                   preferred_element_type=jnp.float32)        # o_proj
    h_mid = x + attn                                          # residual 1

    # ---------------- MLP block ----------------
    h2 = rmsnorm(h_mid, norm_ref[1:2, :]).astype(jnp.bfloat16)
    gate = jnp.dot(h2, w_ref[:, W_COL_G:W_COL_U],
                   preferred_element_type=jnp.float32)        # (M, I)
    up = jnp.dot(h2, w_ref[:, W_COL_U:W_COLS],
                 preferred_element_type=jnp.float32)          # (M, I)
    act = gate * jax.nn.sigmoid(gate) * up                    # SiLU * up, f32
    mlp = jnp.dot(act.astype(jnp.bfloat16), wd_ref[...],
                  preferred_element_type=jnp.float32)         # down_proj

    out_ref[:, 0:HIDDEN] = h_mid + mlp                        # residual 2


# ------------------------- one-time parameter fusion --------------------------
def prepare_params(params):
    """Fuse / cast weights and build constants ONCE, outside the per-call path."""
    f32 = jnp.float32

    wq = params["wq"].astype(f32) / math.sqrt(HEAD_DIM)   # fold score scale into q
    wk = params["wk"].astype(f32)
    wv = params["wv"].astype(f32)

    def rep_cols(w):  # GQA repeat_kv folded into the projection weights
        return jnp.repeat(w.reshape(HIDDEN, NUM_KV_HEADS, HEAD_DIM),
                          N_REP, axis=1).reshape(HIDDEN, Q_WIDTH)

    w_qk = jnp.concatenate([wq, rep_cols(wk)], axis=1)        # (H, 64)

    def rot_cols(w):  # rotate_half folded into weights: rot(x @ W) == x @ (W @ R)
        w4 = w.reshape(HIDDEN, 2 * NUM_HEADS, 2, HEAD_DIM // 2)
        return jnp.concatenate([-w4[:, :, 1], w4[:, :, 0]],
                               axis=2).reshape(HIDDEN, QK_WIDTH)

    w_big = jnp.concatenate(
        [w_qk, rot_cols(w_qk), rep_cols(wv),
         params["wo"].astype(f32), params["wg"].astype(f32),
         params["wu"].astype(f32)], axis=1).astype(jnp.bfloat16)        # (H, 320)
    w_down = params["wd"].astype(jnp.bfloat16)                          # (I, H)

    norms = jnp.concatenate([params["norm1"], params["norm2"]],
                            axis=0).astype(f32)                         # (2, H)

    # block-diagonal attention constants: row-replication matrix + 0/1 head mask
    arep = jnp.tile(jnp.eye(M_ROWS, dtype=f32), (NUM_HEADS, 1))         # (64, 16)
    hmask = jnp.kron(jnp.eye(NUM_HEADS, dtype=f32),
                     jnp.ones((M_ROWS, HEAD_DIM), f32))                 # (64, 32)
    consts = jnp.concatenate([arep, hmask], axis=1)                     # (64, 48)

    # additive mask: causal within a batch element, -1e9 across batch elements
    r = jnp.arange(M_ROWS)
    bq, sq = r // SEQ, r % SEQ
    c = jnp.arange(NUM_HEADS * M_ROWS) % M_ROWS
    bk, tk = c // SEQ, c % SEQ
    ok = (bk[None, :] == bq[:, None]) & (tk[None, :] <= sq[:, None])
    amask = jnp.where(ok, 0.0, MASK_NEG).astype(f32)                    # (16, 64)

    return {"w_big": w_big, "w_down": w_down, "norms": norms,
            "consts": consts, "amask": amask}


# ----------------------------------- wrapper -----------------------------------
@jax.jit
def llama_decoder_layer(x, cos, sin, prep):
    B, S, H = x.shape
    x2d = x.reshape(B * S, H)

    # fused, lane-dense (M, 128) [cos | sin] table tiled to the [q|k_rep] width.
    # (At real Llama sizes pass the compact (M, 2*Dh) table instead and expand
    #  in-kernel; at M=16 the expansion is 8 KiB and saves one input DMA.)
    cos_w = jnp.tile(cos.reshape(B * S, HEAD_DIM).astype(jnp.float32),
                     (1, 2 * NUM_HEADS))
    sin_w = jnp.tile(sin.reshape(B * S, HEAD_DIM).astype(jnp.float32),
                     (1, 2 * NUM_HEADS))
    rope_tab = jnp.concatenate([cos_w, sin_w], axis=1)                  # (16, 128)

    out_all = pl.pallas_call(
        decoder_layer_kernel,
        # single grid step on all chip generations: at 16 rows of work a
        # 2-TensorCore batch split only duplicates launch + weight DMAs.
        grid=(1,),
        in_specs=[
            pl.BlockSpec((M_ROWS, HIDDEN), lambda i: (0, 0)),               # x
            pl.BlockSpec((M_ROWS, ROPE_WIDTH), lambda i: (0, 0)),           # cos|sin
            pl.BlockSpec((2, HIDDEN), lambda i: (0, 0)),                    # norm1|norm2
            pl.BlockSpec((NUM_HEADS * M_ROWS, M_ROWS + Q_WIDTH),
                         lambda i: (0, 0)),                                 # arep|hmask
            pl.BlockSpec((M_ROWS, NUM_HEADS * M_ROWS), lambda i: (0, 0)),   # add. mask
            pl.BlockSpec((HIDDEN, W_COLS), lambda i: (0, 0)),               # fused W
            pl.BlockSpec((INTERMEDIATE, HIDDEN), lambda i: (0, 0)),         # down W
        ],
        out_specs=pl.BlockSpec((M_ROWS, HIDDEN + 2 * Q_WIDTH), lambda i: (0, 0)),
        out_shape=jax.ShapeDtypeStruct((M_ROWS, HIDDEN + 2 * Q_WIDTH),
                                       jnp.float32),
        compiler_params=pltpu.CompilerParams(
            dimension_semantics=("arbitrary",)),
    )(x2d, rope_tab, prep["norms"], prep["consts"], prep["amask"],
      prep["w_big"], prep["w_down"])

    # wrapper-side layout plumbing (free XLA reshapes / strided picks):
    y = out_all[:, :HIDDEN].reshape(B, S, H)
    k_rep = out_all[:, HIDDEN:HIDDEN + Q_WIDTH].reshape(B, S, NUM_HEADS, HEAD_DIM)
    v_rep = out_all[:, HIDDEN + Q_WIDTH:].reshape(B, S, NUM_HEADS, HEAD_DIM)
    k_out = k_rep[:, :, ::N_REP].transpose(0, 2, 1, 3)        # (B, nKV, S, Dh)
    v_out = v_rep[:, :, ::N_REP].transpose(0, 2, 1, 3)
    return y, (k_out, v_out)


# ----------------------------- pure-JAX reference ------------------------------
def reference_decoder_layer(x, cos, sin, params):
    def rmsnorm(h, w):
        var = jnp.mean(h * h, axis=-1, keepdims=True)
        return w * (h * jax.lax.rsqrt(var + RMS_EPS))

    def rope(t, c, s):  # t: (B, nH, S, Dh)
        half = HEAD_DIM // 2
        rot = jnp.concatenate([-t[..., half:], t[..., :half]], axis=-1)
        return t * c + rot * s

    B, S, H = x.shape
    causal = jnp.tril(jnp.ones((S, S), jnp.float32))
    mask = jnp.where(causal == 1.0, 0.0, MASK_NEG)[None, None]          # (1,1,S,S)

    h1 = rmsnorm(x, params["norm1"][0])
    q = h1 @ params["wq"]
    k = h1 @ params["wk"]
    v = h1 @ params["wv"]
    q = q.reshape(B, S, NUM_HEADS, HEAD_DIM).transpose(0, 2, 1, 3)
    k = k.reshape(B, S, NUM_KV_HEADS, HEAD_DIM).transpose(0, 2, 1, 3)
    v = v.reshape(B, S, NUM_KV_HEADS, HEAD_DIM).transpose(0, 2, 1, 3)
    c = cos[:, None]
    s = sin[:, None]
    q = rope(q, c, s)
    k = rope(k, c, s)
    present = (k, v)
    k_rep = jnp.repeat(k, N_REP, axis=1)
    v_rep = jnp.repeat(v, N_REP, axis=1)
    scores = jnp.einsum("bhsd,bhtd->bhst", q, k_rep) / math.sqrt(HEAD_DIM)
    scores = scores + mask
    p = jax.nn.softmax(scores, axis=-1)
    attn = jnp.einsum("bhst,bhtd->bhsd", p, v_rep)
    attn = attn.transpose(0, 2, 1, 3).reshape(B, S, H)
    attn = attn @ params["wo"]
    h_mid = x + attn
    h2 = rmsnorm(h_mid, params["norm2"][0])
    gate = h2 @ params["wg"]
    up = h2 @ params["wu"]
    mlp = (gate * jax.nn.sigmoid(gate) * up) @ params["wd"]
    return h_mid + mlp, present


# ------------------------------------- main -------------------------------------
if __name__ == "__main__":
    key = jax.random.PRNGKey(0)
    ks = jax.random.split(key, 10)
    scale = 0.02

    params = {
        "norm1": jnp.ones((1, HIDDEN), jnp.float32),
        "norm2": jnp.ones((1, HIDDEN), jnp.float32),
        # nn.Linear weight (out,in) acting as x @ W.T == x @ (in,out) here
        "wq": scale * jax.random.normal(ks[0], (HIDDEN, NUM_HEADS * HEAD_DIM), jnp.float32),
        "wk": scale * jax.random.normal(ks[1], (HIDDEN, NUM_KV_HEADS * HEAD_DIM), jnp.float32),
        "wv": scale * jax.random.normal(ks[2], (HIDDEN, NUM_KV_HEADS * HEAD_DIM), jnp.float32),
        "wo": scale * jax.random.normal(ks[3], (HIDDEN, HIDDEN), jnp.float32),
        "wg": scale * jax.random.normal(ks[4], (HIDDEN, INTERMEDIATE), jnp.float32),
        "wu": scale * jax.random.normal(ks[5], (HIDDEN, INTERMEDIATE), jnp.float32),
        "wd": scale * jax.random.normal(ks[6], (INTERMEDIATE, HIDDEN), jnp.float32),
    }

    x = jax.random.normal(ks[7], (BATCH, SEQ, HIDDEN), jnp.float32)

    # RoPE cos/sin cache gathered by position_ids (= arange) outside the kernel.
    inv_freq = 1.0 / (ROPE_BASE ** (jnp.arange(0, HEAD_DIM, 2, dtype=jnp.float32) / HEAD_DIM))
    t = jnp.arange(MAX_POS, dtype=jnp.float32)
    freqs = jnp.einsum("i,j->ij", t, inv_freq)
    emb = jnp.concatenate([freqs, freqs], axis=-1)            # (MAX_POS, Dh)
    position_ids = jnp.broadcast_to(jnp.arange(SEQ), (BATCH, SEQ))
    cos = jnp.cos(emb)[position_ids]                          # (B, S, Dh)
    sin = jnp.sin(emb)[position_ids]                          # (B, S, Dh)

    prep = prepare_params(params)        # one-time fusion, outside per-call path

    out, (k_out, v_out) = llama_decoder_layer(x, cos, sin, prep)
    jax.block_until_ready((out, k_out, v_out))

    ref_out, (ref_k, ref_v) = reference_decoder_layer(x, cos, sin, params)
    assert out.shape == (BATCH, SEQ, HIDDEN)
    assert k_out.shape == (BATCH, NUM_KV_HEADS, SEQ, HEAD_DIM)
    assert v_out.shape == (BATCH, NUM_KV_HEADS, SEQ, HEAD_DIM)
    # bf16 MXU operands / f32 accumulation vs. pure-f32 reference -> 5e-3 tol
    assert jnp.allclose(out, ref_out, atol=5e-3, rtol=5e-3)
    assert jnp.allclose(k_out, ref_k, atol=5e-3, rtol=5e-3)
    assert jnp.allclose(v_out, ref_v, atol=5e-3, rtol=5e-3)

    print("KERNEL_OK")
</pallas_src>

<mosaic_0001>
module attributes {stable_mosaic.version = 11 : i64} {
  func.func @decoder_layer_kernel(%arg0: i32, %arg1: memref<16x32xf32, #tpu.memory_space<vmem>>, %arg2: memref<16x128xf32, #tpu.memory_space<vmem>>, %arg3: memref<2x32xf32, #tpu.memory_space<vmem>>, %arg4: memref<64x48xf32, #tpu.memory_space<vmem>>, %arg5: memref<16x64xf32, #tpu.memory_space<vmem>>, %arg6: memref<32x320xbf16, #tpu.memory_space<vmem>>, %arg7: memref<64x32xbf16, #tpu.memory_space<vmem>>, %arg8: memref<16x96xf32, #tpu.memory_space<vmem>>) attributes {dimension_semantics = [#tpu.dimension_semantics<arbitrary>], iteration_bounds = array<i64: 1>, scalar_prefetch = 0 : i64, scratch_operands = 0 : i64, tpu.core_type = #tpu.core_type<tc>, window_params = [{pipeline_mode = #tpu.pipeline_mode<synchronous>, transform_indices = @transform_0, window_bounds = array<i64: 16, 32>}, {pipeline_mode = #tpu.pipeline_mode<synchronous>, transform_indices = @transform_1, window_bounds = array<i64: 16, 128>}, {pipeline_mode = #tpu.pipeline_mode<synchronous>, transform_indices = @transform_2, window_bounds = array<i64: 2, 32>}, {pipeline_mode = #tpu.pipeline_mode<synchronous>, transform_indices = @transform_3, window_bounds = array<i64: 64, 48>}, {pipeline_mode = #tpu.pipeline_mode<synchronous>, transform_indices = @transform_4, window_bounds = array<i64: 16, 64>}, {pipeline_mode = #tpu.pipeline_mode<synchronous>, transform_indices = @transform_5, window_bounds = array<i64: 32, 320>}, {pipeline_mode = #tpu.pipeline_mode<synchronous>, transform_indices = @transform_6, window_bounds = array<i64: 64, 32>}, {pipeline_mode = #tpu.pipeline_mode<synchronous>, transform_indices = @transform_7, window_bounds = array<i64: 16, 96>}]} {
    %c0 = arith.constant 0 : index
    %c0_0 = arith.constant 0 : index
    %0 = vector.load %arg1[%c0, %c0_0] : memref<16x32xf32, #tpu.memory_space<vmem>>, vector<16x32xf32>
    %c0_1 = arith.constant 0 : index
    %c0_2 = arith.constant 0 : index
    %1 = vector.load %arg3[%c0_1, %c0_2] : memref<2x32xf32, #tpu.memory_space<vmem>>, vector<1x32xf32>
    %2 = arith.mulf %0, %0 : vector<16x32xf32>
    %cst = arith.constant dense<0.000000e+00> : vector<16xf32>
    %3 = vector.multi_reduction <add>, %2, %cst [1] : vector<16x32xf32> to vector<16xf32>
    %4 = vector.shape_cast %3 : vector<16xf32> to vector<16x1xf32>
    %cst_3 = arith.constant 3.200000e+01 : f32
    %5 = vector.broadcast %cst_3 : f32 to vector<16x1xf32>
    %6 = arith.divf %4, %5 : vector<16x1xf32>
    %cst_4 = arith.constant 9.99999997E-7 : f32
    %7 = vector.broadcast %cst_4 : f32 to vector<16x1xf32>
    %8 = arith.addf %6, %7 : vector<16x1xf32>
    %9 = math.rsqrt %8 : vector<16x1xf32>
    %10 = vector.broadcast %9 : vector<16x1xf32> to vector<16x32xf32>
    %11 = arith.mulf %0, %10 : vector<16x32xf32>
    %12 = vector.broadcast %1 : vector<1x32xf32> to vector<16x32xf32>
    %13 = arith.mulf %12, %11 : vector<16x32xf32>
    %14 = arith.truncf %13 : vector<16x32xf32> to vector<16x32xbf16>
    %c0_5 = arith.constant 0 : index
    %c0_6 = arith.constant 0 : index
    %15 = vector.load %arg6[%c0_5, %c0_6] : memref<32x320xbf16, #tpu.memory_space<vmem>>, vector<32x128xbf16>
    %cst_7 = arith.constant dense<0.000000e+00> : vector<16x128xf32>
    %16 = tpu.matmul %14, %15, %cst_7 {dimension_numbers = #tpu.dot_dimension_numbers<[1], [0], [0], [1], [0, 0, 1, 1], [], []>} : vector<16x32xbf16>, vector<32x128xbf16>, vector<16x128xf32> -> vector<16x128xf32>
    %c0_8 = arith.constant 0 : index
    %c128 = arith.constant 128 : index
    %17 = vector.load %arg6[%c0_8, %c128] : memref<32x320xbf16, #tpu.memory_space<vmem>>, vector<32x32xbf16>
    %cst_9 = arith.constant dense<0.000000e+00> : vector<16x32xf32>
    %18 = tpu.matmul %14, %17, %cst_9 {dimension_numbers = #tpu.dot_dimension_numbers<[1], [0], [0], [1], [0, 0, 1, 1], [], []>} : vector<16x32xbf16>, vector<32x32xbf16>, vector<16x32xf32> -> vector<16x32xf32>
    %c0_10 = arith.constant 0 : index
    %c0_11 = arith.constant 0 : index
    %19 = vector.load %arg2[%c0_10, %c0_11] : memref<16x128xf32, #tpu.memory_space<vmem>>, vector<16x128xf32>
    %20 = arith.mulf %16, %19 : vector<16x128xf32>
    %21 = vector.extract_strided_slice %20 {offsets = [0, 0], sizes = [16, 64], strides = [1, 1]} : vector<16x128xf32> to vector<16x64xf32>
    %22 = vector.extract_strided_slice %20 {offsets = [0, 64], sizes = [16, 64], strides = [1, 1]} : vector<16x128xf32> to vector<16x64xf32>
    %23 = arith.addf %21, %22 : vector<16x64xf32>
    %24 = vector.extract_strided_slice %23 {offsets = [0, 0], sizes = [16, 32], strides = [1, 1]} : vector<16x64xf32> to vector<16x32xf32>
    %25 = vector.extract_strided_slice %23 {offsets = [0, 32], sizes = [16, 32], strides = [1, 1]} : vector<16x64xf32> to vector<16x32xf32>
    %c0_12 = arith.constant 0 : index
    %c32 = arith.constant 32 : index
    %26 = vector.load %arg8[%c0_12, %c32] : memref<16x96xf32, #tpu.memory_space<vmem>>, vector<16x32xf32>
    tpu.vector_store %arg8[%c0_12, %c32], %25 {strides = array<i32>} : memref<16x96xf32, #tpu.memory_space<vmem>>, vector<16x32xf32>,
    %c0_13 = arith.constant 0 : index
    %c64 = arith.constant 64 : index
    %27 = vector.load %arg8[%c0_13, %c64] : memref<16x96xf32, #tpu.memory_space<vmem>>, vector<16x32xf32>
    tpu.vector_store %arg8[%c0_13, %c64], %18 {strides = array<i32>} : memref<16x96xf32, #tpu.memory_space<vmem>>, vector<16x32xf32>,
    %c0_14 = arith.constant 0 : index
    %c0_15 = arith.constant 0 : index
    %28 = vector.load %arg4[%c0_14, %c0_15] : memref<64x48xf32, #tpu.memory_space<vmem>>, vector<64x16xf32>
    %c0_16 = arith.constant 0 : index
    %c16 = arith.constant 16 : index
    %29 = vector.load %arg4[%c0_16, %c16] : memref<64x48xf32, #tpu.memory_space<vmem>>, vector<64x32xf32>
    %cst_17 = arith.constant dense<0.000000e+00> : vector<64x32xf32>
    %30 = tpu.matmul %28, %25, %cst_17 {dimension_numbers = #tpu.dot_dimension_numbers<[1], [0], [0], [1], [0, 0, 1, 1], [], []>} : vector<64x16xf32>, vector<16x32xf32>, vector<64x32xf32> -> vector<64x32xf32>
    %31 = arith.mulf %30, %29 : vector<64x32xf32>
    %cst_18 = arith.constant dense<0.000000e+00> : vector<64x32xf32>
    %32 = tpu.matmul %28, %18, %cst_18 {dimension_numbers = #tpu.dot_dimension_numbers<[1], [0], [0], [1], [0, 0, 1, 1], [], []>} : vector<64x16xf32>, vector<16x32xf32>, vector<64x32xf32> -> vector<64x32xf32>
    %33 = arith.mulf %32, %29 : vector<64x32xf32>
    %34 = tpu.transpose %31, [1, 0] : vector<64x32xf32> -> vector<32x64xf32>
    %cst_19 = arith.constant dense<0.000000e+00> : vector<16x64xf32>
    %35 = tpu.matmul %24, %34, %cst_19 {dimension_numbers = #tpu.dot_dimension_numbers<[1], [0], [0], [1], [0, 0, 1, 1], [], []>} : vector<16x32xf32>, vector<32x64xf32>, vector<16x64xf32> -> vector<16x64xf32>
    %c0_20 = arith.constant 0 : index
    %c0_21 = arith.constant 0 : index
    %36 = vector.load %arg5[%c0_20, %c0_21] : memref<16x64xf32, #tpu.memory_space<vmem>>, vector<16x64xf32>
    %37 = arith.addf %35, %36 : vector<16x64xf32>
    %cst_22 = arith.constant dense<0xFF800000> : vector<16xf32>
    %38 = vector.multi_reduction <maximumf>, %37, %cst_22 [1] : vector<16x64xf32> to vector<16xf32>
    %39 = vector.shape_cast %38 : vector<16xf32> to vector<16x1xf32>
    %40 = vector.broadcast %39 : vector<16x1xf32> to vector<16x64xf32>
    %41 = arith.subf %37, %40 : vector<16x64xf32>
    %42 = math.exp %41 : vector<16x64xf32>
    %cst_23 = arith.constant dense<0.000000e+00> : vector<16x32xf32>
    %43 = tpu.matmul %42, %33, %cst_23 {dimension_numbers = #tpu.dot_dimension_numbers<[1], [0], [0], [1], [0, 0, 1, 1], [], []>} : vector<16x64xf32>, vector<64x32xf32>, vector<16x32xf32> -> vector<16x32xf32>
    %cst_24 = arith.constant dense<0.000000e+00> : vector<16x32xf32>
    %44 = tpu.matmul %42, %29, %cst_24 {dimension_numbers = #tpu.dot_dimension_numbers<[1], [0], [0], [1], [0, 0, 1, 1], [], []>} : vector<16x64xf32>, vector<64x32xf32>, vector<16x32xf32> -> vector<16x32xf32>
    %45 = arith.divf %43, %44 : vector<16x32xf32>
    %46 = arith.truncf %45 : vector<16x32xf32> to vector<16x32xbf16>
    %c0_25 = arith.constant 0 : index
    %c160 = arith.constant 160 : index
    %47 = vector.load %arg6[%c0_25, %c160] : memref<32x320xbf16, #tpu.memory_space<vmem>>, vector<32x32xbf16>
    %cst_26 = arith.constant dense<0.000000e+00> : vector<16x32xf32>
    %48 = tpu.matmul %46, %47, %cst_26 {dimension_numbers = #tpu.dot_dimension_numbers<[1], [0], [0], [1], [0, 0, 1, 1], [], []>} : vector<16x32xbf16>, vector<32x32xbf16>, vector<16x32xf32> -> vector<16x32xf32>
    %49 = arith.addf %0, %48 : vector<16x32xf32>
    %c1 = arith.constant 1 : index
    %c0_27 = arith.constant 0 : index
    %50 = vector.load %arg3[%c1, %c0_27] : memref<2x32xf32, #tpu.memory_space<vmem>>, vector<1x32xf32>
    %51 = arith.mulf %49, %49 : vector<16x32xf32>
    %cst_28 = arith.constant dense<0.000000e+00> : vector<16xf32>
    %52 = vector.multi_reduction <add>, %51, %cst_28 [1] : vector<16x32xf32> to vector<16xf32>
    %53 = vector.shape_cast %52 : vector<16xf32> to vector<16x1xf32>
    %cst_29 = arith.constant 3.200000e+01 : f32
    %54 = vector.broadcast %cst_29 : f32 to vector<16x1xf32>
    %55 = arith.divf %53, %54 : vector<16x1xf32>
    %cst_30 = arith.constant 9.99999997E-7 : f32
    %56 = vector.broadcast %cst_30 : f32 to vector<16x1xf32>
    %57 = arith.addf %55, %56 : vector<16x1xf32>
    %58 = math.rsqrt %57 : vector<16x1xf32>
    %59 = vector.broadcast %58 : vector<16x1xf32> to vector<16x32xf32>
    %60 = arith.mulf %49, %59 : vector<16x32xf32>
    %61 = vector.broadcast %50 : vector<1x32xf32> to vector<16x32xf32>
    %62 = arith.mulf %61, %60 : vector<16x32xf32>
    %63 = arith.truncf %62 : vector<16x32xf32> to vector<16x32xbf16>
    %c0_31 = arith.constant 0 : index
    %c192 = arith.constant 192 : index
    %64 = vector.load %arg6[%c0_31, %c192] : memref<32x320xbf16, #tpu.memory_space<vmem>>, vector<32x64xbf16>
    %cst_32 = arith.constant dense<0.000000e+00> : vector<16x64xf32>
    %65 = tpu.matmul %63, %64, %cst_32 {dimension_numbers = #tpu.dot_dimension_numbers<[1], [0], [0], [1], [0, 0, 1, 1], [], []>} : vector<16x32xbf16>, vector<32x64xbf16>, vector<16x64xf32> -> vector<16x64xf32>
    %c0_33 = arith.constant 0 : index
    %c256 = arith.constant 256 : index
    %66 = vector.load %arg6[%c0_33, %c256] : memref<32x320xbf16, #tpu.memory_space<vmem>>, vector<32x64xbf16>
    %cst_34 = arith.constant dense<0.000000e+00> : vector<16x64xf32>
    %67 = tpu.matmul %63, %66, %cst_34 {dimension_numbers = #tpu.dot_dimension_numbers<[1], [0], [0], [1], [0, 0, 1, 1], [], []>} : vector<16x32xbf16>, vector<32x64xbf16>, vector<16x64xf32> -> vector<16x64xf32>
    %68 = arith.negf %65 : vector<16x64xf32>
    %69 = math.exp %68 : vector<16x64xf32>
    %cst_35 = arith.constant 1.000000e+00 : f32
    %70 = vector.broadcast %cst_35 : f32 to vector<16x64xf32>
    %71 = arith.addf %70, %69 : vector<16x64xf32>
    %72 = arith.divf %70, %71 : vector<16x64xf32>
    %73 = arith.mulf %65, %72 : vector<16x64xf32>
    %74 = arith.mulf %73, %67 : vector<16x64xf32>
    %75 = arith.truncf %74 : vector<16x64xf32> to vector<16x64xbf16>
    %c0_36 = arith.constant 0 : index
    %c0_37 = arith.constant 0 : index
    %76 = vector.load %arg7[%c0_36, %c0_37] : memref<64x32xbf16, #tpu.memory_space<vmem>>, vector<64x32xbf16>
    %cst_38 = arith.constant dense<0.000000e+00> : vector<16x32xf32>
    %77 = tpu.matmul %75, %76, %cst_38 {dimension_numbers = #tpu.dot_dimension_numbers<[1], [0], [0], [1], [0, 0, 1, 1], [], []>} : vector<16x64xbf16>, vector<64x32xbf16>, vector<16x32xf32> -> vector<16x32xf32>
    %78 = arith.addf %49, %77 : vector<16x32xf32>
    %c0_39 = arith.constant 0 : index
    %c0_40 = arith.constant 0 : index
    %79 = vector.load %arg8[%c0_39, %c0_40] : memref<16x96xf32, #tpu.memory_space<vmem>>, vector<16x32xf32>
    tpu.vector_store %arg8[%c0_39, %c0_40], %78 {strides = array<i32>} : memref<16x96xf32, #tpu.memory_space<vmem>>, vector<16x32xf32>,
    return
  }
  func.func @transform_0(%arg0: i32) -> (i32, i32) {
    %c0_i32 = arith.constant 0 : i32
    %c0_i32_0 = arith.constant 0 : i32
    %c0_i32_1 = arith.constant 0 : i32
    return %c0_i32, %c0_i32_0 : i32, i32
  }
  func.func @transform_1(%arg0: i32) -> (i32, i32) {
    %c0_i32 = arith.constant 0 : i32
    %c0_i32_0 = arith.constant 0 : i32
    %c0_i32_1 = arith.constant 0 : i32
    return %c0_i32, %c0_i32_0 : i32, i32
  }
  func.func @transform_2(%arg0: i32) -> (i32, i32) {
    %c0_i32 = arith.constant 0 : i32
    %c0_i32_0 = arith.constant 0 : i32
    %c0_i32_1 = arith.constant 0 : i32
    return %c0_i32, %c0_i32_0 : i32, i32
  }
  func.func @transform_3(%arg0: i32) -> (i32, i32) {
    %c0_i32 = arith.constant 0 : i32
    %c0_i32_0 = arith.constant 0 : i32
    %c0_i32_1 = arith.constant 0 : i32
    return %c0_i32, %c0_i32_0 : i32, i32
  }
  func.func @transform_4(%arg0: i32) -> (i32, i32) {
    %c0_i32 = arith.constant 0 : i32
    %c0_i32_0 = arith.constant 0 : i32
    %c0_i32_1 = arith.constant 0 : i32
    return %c0_i32, %c0_i32_0 : i32, i32
  }
  func.func @transform_5(%arg0: i32) -> (i32, i32) {
    %c0_i32 = arith.constant 0 : i32
    %c0_i32_0 = arith.constant 0 : i32
    %c0_i32_1 = arith.constant 0 : i32
    return %c0_i32, %c0_i32_0 : i32, i32
  }
  func.func @transform_6(%arg0: i32) -> (i32, i32) {
    %c0_i32 = arith.constant 0 : i32
    %c0_i32_0 = arith.constant 0 : i32
    %c0_i32_1 = arith.constant 0 : i32
    return %c0_i32, %c0_i32_0 : i32, i32
  }
  func.func @transform_7(%arg0: i32) -> (i32, i32) {
    %c0_i32 = arith.constant 0 : i32
    %c0_i32_0 = arith.constant 0 : i32
    %c0_i32_1 = arith.constant 0 : i32
    return %c0_i32, %c0_i32_0 : i32, i32
  }
}

</mosaic_0001>

<llo_original>
// kernel: llama_decoder_layer.1
$region0: #{llama_decoder_layer.1}
  #allocation0 [shape = 'u32[]', space=smem, size = 0x4, offset = 0x4, fixed_abs, tag = 'smem constant byte address 0x4 - core index']
  #allocation1 [shape = 'u32[72,128]{1,0:T(1,128)}', space=vmem, size = 0x9000, scoped, tag = 'internal scratch']
  %s0 = inlined_call_operand.vmem [shape: f32[16,32], index: 0, kind: input, shape index: {}]
  %s1 = inlined_call_operand.vmem [shape: f32[16,128], index: 1, kind: input, shape index: {}]
  %s2 = inlined_call_operand.vmem [shape: f32[2,32], index: 2, kind: input, shape index: {}]
  %s3 = inlined_call_operand.vmem [shape: f32[64,48], index: 3, kind: input, shape index: {}]
  %s4 = inlined_call_operand.vmem [shape: f32[16,64], index: 4, kind: input, shape index: {}]
  %s5 = inlined_call_operand.vmem [shape: bf16[32,320], index: 5, kind: input, shape index: {}]
  %s6 = inlined_call_operand.vmem [shape: bf16[64,32], index: 6, kind: input, shape index: {}]
  %s7 = inlined_call_operand.vmem [shape: f32[16,96], index: 7, kind: output, shape index: {}]
  %s8 = sld [smem:[#allocation0]]
  $region38: #{llama_decoder_layer.1} parent=0
    _
  %s10 = ssub.s32 1, %s8
  %s11 = scalar_select 0, %s10, %s8
  // Predicated region
  $region2: #{llama_decoder_layer.1} parent=0 // pred_check
    _
  $region3: #{llama_decoder_layer.1} parent=0 // pred_check_branch
    %13 = sbr.rel (0) target = $region5
  $region4: #{llama_decoder_layer.1} parent=0 // pred_region
    _
  $region5: #{llama_decoder_layer.1} parent=0 // pred_fallthru
    _
  // Predicated region
  $region6: #{llama_decoder_layer.1} parent=0 // pred_check
    _
  $region7: #{llama_decoder_layer.1} parent=0 // pred_check_branch
    %15 = sbr.rel (0) target = $region9
  $region8: #{llama_decoder_layer.1} parent=0 // pred_region
    _
  $region9: #{llama_decoder_layer.1} parent=0 // pred_fallthru
    _
  // Predicated region
  $region10: #{llama_decoder_layer.1} parent=0 // pred_check
    _
  $region11: #{llama_decoder_layer.1} parent=0 // pred_check_branch
    %17 = sbr.rel (0) target = $region13
  $region12: #{llama_decoder_layer.1} parent=0 // pred_region
    _
  $region13: #{llama_decoder_layer.1} parent=0 // pred_fallthru
    _
  // Predicated region
  $region14: #{llama_decoder_layer.1} parent=0 // pred_check
    _
  $region15: #{llama_decoder_layer.1} parent=0 // pred_check_branch
    %19 = sbr.rel (0) target = $region17
  $region16: #{llama_decoder_layer.1} parent=0 // pred_region
    _
  $region17: #{llama_decoder_layer.1} parent=0 // pred_fallthru
    _
  // Predicated region
  $region18: #{llama_decoder_layer.1} parent=0 // pred_check
    _
  $region19: #{llama_decoder_layer.1} parent=0 // pred_check_branch
    %21 = sbr.rel (0) target = $region21
  $region20: #{llama_decoder_layer.1} parent=0 // pred_region
    _
  $region21: #{llama_decoder_layer.1} parent=0 // pred_fallthru
    _
  // Predicated region
  $region22: #{llama_decoder_layer.1} parent=0 // pred_check
    _
  $region23: #{llama_decoder_layer.1} parent=0 // pred_check_branch
    %23 = sbr.rel (0) target = $region25
  $region24: #{llama_decoder_layer.1} parent=0 // pred_region
    _
  $region25: #{llama_decoder_layer.1} parent=0 // pred_fallthru
    _
  // Predicated region
  $region26: #{llama_decoder_layer.1} parent=0 // pred_check
    _
  $region27: #{llama_decoder_layer.1} parent=0 // pred_check_branch
    %25 = sbr.rel (0) target = $region29
  $region28: #{llama_decoder_layer.1} parent=0 // pred_region
    _
  $region29: #{llama_decoder_layer.1} parent=0 // pred_fallthru
    _
  %v27 = vld [vmem:[%s0] sm:$0xff]
  %v28 = vld [vmem:[%s0 + $0x8] sm:$0xff]
  %v29 = vld [vmem:[%s2] sm:$0x1]
  %v30 = vmul.f32 %v27, %v27
  %v31 = vmul.f32 %v28, %v28
  %vm32 = vcmask 261120
  %v33 = vsel %vm32, %v30, 0.0
  %34 = vadd.xlane.f32.xlu0 %v33
  %v35 = vpop.xlane.xlu0 %34
  %v36 = vsel %vm32, %v31, 0.0
  %37 = vadd.xlane.f32.xlu0 %v36
  %v38 = vpop.xlane.xlu0 %37
  %v39 = vrcp.pop 32.0
  %v40 = vmul.f32 32.0, %v39
  %v41 = vsub.f32 1.0, %v40
  %v42 = vmul.f32 %v39, %v41
  %v43 = vadd.f32 %v39, %v42
  %vm44 = vweird.f32 %v39
  %v45 = vsel %vm44, %v39, %v43
  %v46 = vmul.f32 %v35, %v45
  %v47 = vmul.f32 %v38, %v45
  %v48 = vadd.f32 %v46, 1e-06
  %v49 = vadd.f32 %v47, 1e-06
  %v50 = vrsqrt.pop %v48
  %v51 = vmul.f32 %v50, %v48
  %v52 = vmul.f32 %v51, %v50
  %v53 = vmul.f32 0.5, %v52
  %v54 = vsub.f32 1.5, %v53
  %v55 = vmul.f32 %v50, %v54
  %vm56 = vweird.f32 %v48
  %vm57 = vweird.f32 %v50
  %vm58 = vmor %vm56, %vm57
  %v59 = vsel %vm58, %v50, %v55
  %v60 = vrsqrt.pop %v49
  %v61 = vmul.f32 %v60, %v49
  %v62 = vmul.f32 %v61, %v60
  %v63 = vmul.f32 0.5, %v62
  %v64 = vsub.f32 1.5, %v63
  %v65 = vmul.f32 %v60, %v64
  %vm66 = vweird.f32 %v49
  %vm67 = vweird.f32 %v60
  %vm68 = vmor %vm66, %vm67
  %v69 = vsel %vm68, %v60, %v65
  %v70 = vmul.f32 %v27, %v59
  %v71 = vmul.f32 %v28, %v69
  %v72 = vperm.slane %v29, 0
  %v73 = vmul.f32 %v72, %v70
  %v74 = vmul.f32 %v72, %v71
  %v75 = vpack.c.bf16 %v74, %v73
  %v76 = vld [vmem:[%s5] sm:$0xf]
  %v77 = vld [vmem:[%s5 + $0xc] sm:$0xf]
  %v78 = vld [vmem:[%s5 + $0x18] sm:$0xf]
  %v79 = vld [vmem:[%s5 + $0x24] sm:$0xf]
  %v84 = vunpack.c.l.b16 %v76
  %v85 = vunpack.c.l.b16 %v77
  %v86 = vunpack.c.l.b16 %v78
  %v87 = vunpack.c.l.b16 %v79
  %v88 = vpack.c.b16 %v85, %v84
  %v89 = vpack.c.b16 %v87, %v86
  %v93 = vsel %vm32, %v75, 0
  %95 = vmatpush.bf16.msra.mxu0 0
  %96 = vmatpush.bf16.msra.mxu0 0
  %97 = vmatpush.bf16.msra.mxu0 0
  %98 = vmatpush.bf16.msra.mxu0 0
  %99 = vmatpush.bf16.msra.mxu0 0
  %100 = vmatpush.bf16.msra.mxu0 0
  %101 = vmatpush.bf16.msra.mxu0 %v89
  %102 = vmatpush.bf16.msra.mxu0 %v88
  %103 = vmatmul.bf16.gmra.mxu0 %v93
  %v104 = vpop.f32.mrf.mxu0
  %v105 = vadd.f32 0.0, %v104
  %v106 = vpop.f32.mrf.mxu0
  %v107 = vadd.f32 0.0, %v106
  %108 = vdwg.mxu0
  %v109 = vld [vmem:[%s5 + $0x4] sm:$0xf]
  %v110 = vld [vmem:[%s5 + $0x10] sm:$0xf]
  %v111 = vld [vmem:[%s5 + $0x1c] sm:$0xf]
  %v112 = vld [vmem:[%s5 + $0x28] sm:$0xf]
  %v117 = vunpack.c.l.b16 %v109
  %v118 = vunpack.c.l.b16 %v110
  %v119 = vunpack.c.l.b16 %v111
  %v120 = vunpack.c.l.b16 %v112
  %v121 = vpack.c.b16 %v118, %v117
  %v122 = vpack.c.b16 %v120, %v119
  %125 = vmatpush.bf16.msra.mxu0 0
  %126 = vmatpush.bf16.msra.mxu0 0
  %127 = vmatpush.bf16.msra.mxu0 0
  %128 = vmatpush.bf16.msra.mxu0 0
  %129 = vmatpush.bf16.msra.mxu0 0
  %130 = vmatpush.bf16.msra.mxu0 0
  %131 = vmatpush.bf16.msra.mxu0 %v122
  %132 = vmatpush.bf16.msra.mxu0 %v121
  %133 = vmatmul.bf16.gmra.mxu0 %v93
  %v134 = vpop.f32.mrf.mxu0
  %v135 = vadd.f32 0.0, %v134
  %v136 = vpop.f32.mrf.mxu0
  %v137 = vadd.f32 0.0, %v136
  %138 = vdwg.mxu0
  %v139 = vld [vmem:[%s1] sm:$0xff]
  %v140 = vld [vmem:[%s1 + $0x8] sm:$0xff]
  %v141 = vmul.f32 %v105, %v139
  %v142 = vmul.f32 %v107, %v140
  %145 = vrot.lane.b32.xlu0 %v141, 64
  %v146 = vpop.permute.xlu0 %145
  %147 = vrot.lane.b32.xlu0 %v142, 64
  %v148 = vpop.permute.xlu0 %147
  %v151 = vadd.f32 %v141, %v146
  %v152 = vadd.f32 %v142, %v148
  %vm153 = vcmask 523520
  %154 = vst.msk [vmem:[%s7] sm:$0xff] %vm153, %v151
  %155 = vst.msk [vmem:[%s7 + $0x8] sm:$0xff] %vm153, %v152
  %158 = vrot.lane.b32.xlu0 %v135, 64
  %v159 = vpop.permute.xlu0 %158
  %160 = vrot.lane.b32.xlu0 %v137, 64
  %v161 = vpop.permute.xlu0 %160
  %vm164 = vcmask 785920
  %165 = vst.msk [vmem:[%s7] sm:$0xff] %vm164, %v159
  %166 = vst.msk [vmem:[%s7 + $0x8] sm:$0xff] %vm164, %v161
  %v167 = vld [vmem:[%s3] sm:$0xff]
  %v168 = vld [vmem:[%s3 + $0x8] sm:$0xff]
  %v169 = vld [vmem:[%s3 + $0x10] sm:$0xff]
  %v170 = vld [vmem:[%s3 + $0x18] sm:$0xff]
  %v171 = vld [vmem:[%s3 + $0x20] sm:$0xff]
  %v172 = vld [vmem:[%s3 + $0x28] sm:$0xff]
  %v173 = vld [vmem:[%s3 + $0x30] sm:$0xff]
  %v174 = vld [vmem:[%s3 + $0x38] sm:$0xff]
  %177 = vrot.lane.b32.xlu0 %v151, 96
  %v178 = vpop.permute.xlu0 %177
  %179 = vrot.lane.b32.xlu0 %v152, 96
  %v180 = vpop.permute.xlu0 %179
  %vm183 = vcmask 130048
  %v185 = vsel %vm183, %v167, 0
  %v188 = vsel %vm183, %v168, 0
  %v191 = vsel %vm183, %v169, 0
  %v194 = vsel %vm183, %v170, 0
  %v197 = vsel %vm183, %v171, 0
  %v200 = vsel %vm183, %v172, 0
  %v203 = vsel %vm183, %v173, 0
  %v206 = vsel %vm183, %v174, 0
  %208 = vmatpush.msra.mxu0 0.0
  %209 = vmatpush.msra.mxu0 0.0
  %210 = vmatpush.msra.mxu0 0.0
  %211 = vmatpush.msra.mxu0 0.0
  %212 = vmatpush.msra.mxu0 0.0
  %213 = vmatpush.msra.mxu0 0.0
  %214 = vmatpush.msra.mxu0 0.0
  %215 = vmatpush.msra.mxu0 0.0
  %216 = vmatpush.msra.mxu0 0.0
  %217 = vmatpush.msra.mxu0 0.0
  %218 = vmatpush.msra.mxu0 0.0
  %219 = vmatpush.msra.mxu0 0.0
  %220 = vmatpush.msra.mxu0 0.0
  %221 = vmatpush.msra.mxu0 0.0
  %222 = vmatpush.msra.mxu0 %v180
  %223 = vmatpush.msra.mxu0 %v178
  %224 = vmatmul.f32.gmra.mxu0 %v185
  %v225 = vpop.f32.mrf.mxu0
  %v226 = vadd.f32 0.0, %v225
  %227 = vmatmul.f32.gmra.mxu0 %v188
  %v228 = vpop.f32.mrf.mxu0
  %v229 = vadd.f32 0.0, %v228
  %230 = vmatmul.f32.gmra.mxu0 %v191
  %v231 = vpop.f32.mrf.mxu0
  %v232 = vadd.f32 0.0, %v231
  %233 = vmatmul.f32.gmra.mxu0 %v194
  %v234 = vpop.f32.mrf.mxu0
  %v235 = vadd.f32 0.0, %v234
  %236 = vmatmul.f32.gmra.mxu0 %v197
  %v237 = vpop.f32.mrf.mxu0
  %v238 = vadd.f32 0.0, %v237
  %239 = vmatmul.f32.gmra.mxu0 %v200
  %v240 = vpop.f32.mrf.mxu0
  %v241 = vadd.f32 0.0, %v240
  %242 = vmatmul.f32.gmra.mxu0 %v203
  %v243 = vpop.f32.mrf.mxu0
  %v244 = vadd.f32 0.0, %v243
  %245 = vmatmul.f32.gmra.mxu0 %v206
  %v246 = vpop.f32.mrf.mxu0
  %v247 = vadd.f32 0.0, %v246
  %248 = vdwg.mxu0
  %249 = vrot.lane.b32.xlu0 %v167, 112
  %v250 = vpop.permute.xlu0 %249
  %251 = vrot.lane.b32.xlu0 %v168, 112
  %v252 = vpop.permute.xlu0 %251
  %253 = vrot.lane.b32.xlu0 %v169, 112
  %v254 = vpop.permute.xlu0 %253
  %255 = vrot.lane.b32.xlu0 %v170, 112
  %v256 = vpop.permute.xlu0 %255
  %257 = vrot.lane.b32.xlu0 %v171, 112
  %v258 = vpop.permute.xlu0 %257
  %259 = vrot.lane.b32.xlu0 %v172, 112
  %v260 = vpop.permute.xlu0 %259
  %261 = vrot.lane.b32.xlu0 %v173, 112
  %v262 = vpop.permute.xlu0 %261
  %263 = vrot.lane.b32.xlu0 %v174, 112
  %v264 = vpop.permute.xlu0 %263
  %v273 = vmul.f32 %v226, %v250
  %v274 = vmul.f32 %v229, %v252
  %v275 = vmul.f32 %v232, %v254
  %v276 = vmul.f32 %v235, %v256
  %v277 = vmul.f32 %v238, %v258
  %v278 = vmul.f32 %v241, %v260
  %v279 = vmul.f32 %v244, %v262
  %v280 = vmul.f32 %v247, %v264
  %281 = vmatpush.msra.mxu0 0.0
  %282 = vmatpush.msra.mxu0 0.0
  %283 = vmatpush.msra.mxu0 0.0
  %284 = vmatpush.msra.mxu0 0.0
  %285 = vmatpush.msra.mxu0 0.0
  %286 = vmatpush.msra.mxu0 0.0
  %287 = vmatpush.msra.mxu0 0.0
  %288 = vmatpush.msra.mxu0 0.0
  %289 = vmatpush.msra.mxu0 0.0
  %290 = vmatpush.msra.mxu0 0.0
  %291 = vmatpush.msra.mxu0 0.0
  %292 = vmatpush.msra.mxu0 0.0
  %293 = vmatpush.msra.mxu0 0.0
  %294 = vmatpush.msra.mxu0 0.0
  %295 = vmatpush.msra.mxu0 %v137
  %296 = vmatpush.msra.mxu0 %v135
  %297 = vmatmul.f32.gmra.mxu0 %v185
  %v298 = vpop.f32.mrf.mxu0
  %v299 = vadd.f32 0.0, %v298
  %300 = vmatmul.f32.gmra.mxu0 %v188
  %v301 = vpop.f32.mrf.mxu0
  %v302 = vadd.f32 0.0, %v301
  %303 = vmatmul.f32.gmra.mxu0 %v191
  %v304 = vpop.f32.mrf.mxu0
  %v305 = vadd.f32 0.0, %v304
  %306 = vmatmul.f32.gmra.mxu0 %v194
  %v307 = vpop.f32.mrf.mxu0
  %v308 = vadd.f32 0.0, %v307
  %309 = vmatmul.f32.gmra.mxu0 %v197
  %v310 = vpop.f32.mrf.mxu0
  %v311 = vadd.f32 0.0, %v310
  %312 = vmatmul.f32.gmra.mxu0 %v200
  %v313 = vpop.f32.mrf.mxu0
  %v314 = vadd.f32 0.0, %v313
  %315 = vmatmul.f32.gmra.mxu0 %v203
  %v316 = vpop.f32.mrf.mxu0
  %v317 = vadd.f32 0.0, %v316
  %318 = vmatmul.f32.gmra.mxu0 %v206
  %v319 = vpop.f32.mrf.mxu0
  %v320 = vadd.f32 0.0, %v319
  %321 = vdwg.mxu0
  %v322 = vmul.f32 %v299, %v250
  %v323 = vmul.f32 %v302, %v252
  %v324 = vmul.f32 %v305, %v254
  %v325 = vmul.f32 %v308, %v256
  %v326 = vmul.f32 %v311, %v258
  %v327 = vmul.f32 %v314, %v260
  %v328 = vmul.f32 %v317, %v262
  %v329 = vmul.f32 %v320, %v264
  %v330 = vld [vmem:[%s4] sm:$0xff]
  %v331 = vld [vmem:[%s4 + $0x8] sm:$0xff]
  %v332 = vsel %vm32, %v151, 0
  %v334 = vsel %vm32, %v152, 0
  %v337 = vsel %vm32, %v273, 0
  %v340 = vsel %vm32, %v274, 0
  %v343 = vsel %vm32, %v275, 0
  %v346 = vsel %vm32, %v276, 0
  %v349 = vsel %vm32, %v277, 0
  %v352 = vsel %vm32, %v278, 0
  %v355 = vsel %vm32, %v279, 0
  %v358 = vsel %vm32, %v280, 0
  %360 = vmatpush.xpose.msra.mxu0 0.0
  %361 = vmatpush.xpose.msra.mxu0 0.0
  %362 = vmatpush.xpose.msra.mxu0 0.0
  %363 = vmatpush.xpose.msra.mxu0 0.0
  %364 = vmatpush.xpose.msra.mxu0 0.0
  %365 = vmatpush.xpose.msra.mxu0 0.0
  %366 = vmatpush.xpose.msra.mxu0 0.0
  %367 = vmatpush.xpose.msra.mxu0 0.0
  %368 = vmatpush.xpose.msra.mxu0 %v358
  %369 = vmatpush.xpose.msra.mxu0 %v355
  %370 = vmatpush.xpose.msra.mxu0 %v352
  %371 = vmatpush.xpose.msra.mxu0 %v349
  %372 = vmatpush.xpose.msra.mxu0 %v346
  %373 = vmatpush.xpose.msra.mxu0 %v343
  %374 = vmatpush.xpose.msra.mxu0 %v340
  %375 = vmatpush.xpose.msra.mxu0 %v337
  %376 = vmatmul.f32.gmra.mxu0 %v332
  %v377 = vpop.f32.mrf.mxu0
  %v378 = vadd.f32 %v330, %v377
  %379 = vmatmul.f32.gmra.mxu0 %v334
  %v380 = vpop.f32.mrf.mxu0
  %v381 = vadd.f32 %v331, %v380
  %382 = vdwg.mxu0
  %vm383 = vcmask 523264
  %v384 = vsel %vm383, %v378, -inf
  %385 = vmax.xlane.f32.xlu0 %v384
  %v386 = vpop.xlane.xlu0 %385
  %v387 = vsel %vm383, %v381, -inf
  %388 = vmax.xlane.f32.xlu0 %v387
  %v389 = vpop.xlane.xlu0 %388
  %v390 = vsub.f32 %v378, %v386
  %v391 = vsub.f32 %v381, %v389
  %v392 = vmul.f32 %v390, 1.442695
  %v393 = vpow.pop %v392
  %v394 = vmul.f32 %v391, 1.442695
  %v395 = vpow.pop %v394
  %v397 = vsel %vm383, %v393, 0
  %v400 = vsel %vm383, %v395, 0
  %402 = vmatpush.msra.mxu0 0.0
  %403 = vmatpush.msra.mxu0 0.0
  %404 = vmatpush.msra.mxu0 0.0
  %405 = vmatpush.msra.mxu0 0.0
  %406 = vmatpush.msra.mxu0 0.0
  %407 = vmatpush.msra.mxu0 0.0
  %408 = vmatpush.msra.mxu0 0.0
  %409 = vmatpush.msra.mxu0 0.0
  %410 = vmatpush.msra.mxu0 %v329
  %411 = vmatpush.msra.mxu0 %v328
  %412 = vmatpush.msra.mxu0 %v327
  %413 = vmatpush.msra.mxu0 %v326
  %414 = vmatpush.msra.mxu0 %v325
  %415 = vmatpush.msra.mxu0 %v324
  %416 = vmatpush.msra.mxu0 %v323
  %417 = vmatpush.msra.mxu0 %v322
  %418 = vmatmul.f32.gmra.mxu0 %v397
  %v419 = vpop.f32.mrf.mxu0
  %v420 = vadd.f32 0.0, %v419
  %421 = vmatmul.f32.gmra.mxu0 %v400
  %v422 = vpop.f32.mrf.mxu0
  %v423 = vadd.f32 0.0, %v422
  %424 = vdwg.mxu0
  %425 = vmatpush.msra.mxu0 0.0
  %426 = vmatpush.msra.mxu0 0.0
  %427 = vmatpush.msra.mxu0 0.0
  %428 = vmatpush.msra.mxu0 0.0
  %429 = vmatpush.msra.mxu0 0.0
  %430 = vmatpush.msra.mxu0 0.0
  %431 = vmatpush.msra.mxu0 0.0
  %432 = vmatpush.msra.mxu0 0.0
  %433 = vmatpush.msra.mxu0 %v264
  %434 = vmatpush.msra.mxu0 %v262
  %435 = vmatpush.msra.mxu0 %v260
  %436 = vmatpush.msra.mxu0 %v258
  %437 = vmatpush.msra.mxu0 %v256
  %438 = vmatpush.msra.mxu0 %v254
  %439 = vmatpush.msra.mxu0 %v252
  %440 = vmatpush.msra.mxu0 %v250
  %441 = vmatmul.f32.gmra.mxu0 %v397
  %v442 = vpop.f32.mrf.mxu0
  %v443 = vadd.f32 0.0, %v442
  %444 = vmatmul.f32.gmra.mxu0 %v400
  %v445 = vpop.f32.mrf.mxu0
  %v446 = vadd.f32 0.0, %v445
  %447 = vdwg.mxu0
  %v448 = vrcp.pop %v443
  %v449 = vmul.f32 %v443, %v448
  %v450 = vsub.f32 1.0, %v449
  %v451 = vmul.f32 %v448, %v450
  %v452 = vadd.f32 %v448, %v451
  %vm453 = vweird.f32 %v443
  %vm454 = vweird.f32 %v448
  %vm455 = vmor %vm453, %vm454
  %v456 = vsel %vm455, %v448, %v452
  %v457 = vand.u32 2147483647, %v443
  %vm458 = vcmp.eq.f32.partialorder %v457, 8.507059e+37
  %v459 = vand.u32 %v443, 2147483648
  %v460 = vor.u32 1.1754944e-38, %v459
  %v461 = vsel %vm458, %v460, %v456
  %v462 = vmul.f32 %v420, %v461
  %v463 = vrcp.pop %v446
  %v464 = vmul.f32 %v446, %v463
  %v465 = vsub.f32 1.0, %v464
  %v466 = vmul.f32 %v463, %v465
  %v467 = vadd.f32 %v463, %v466
  %vm468 = vweird.f32 %v446
  %vm469 = vweird.f32 %v463
  %vm470 = vmor %vm468, %vm469
  %v471 = vsel %vm470, %v463, %v467
  %v472 = vand.u32 2147483647, %v446
  %vm473 = vcmp.eq.f32.partialorder %v472, 8.507059e+37
  %v474 = vand.u32 %v446, 2147483648
  %v475 = vor.u32 1.1754944e-38, %v474
  %v476 = vsel %vm473, %v475, %v471
  %v477 = vmul.f32 %v423, %v476
  %v478 = vpack.c.bf16 %v477, %v462
  %v479 = vld [vmem:[%s5 + $0x4] sm:$0xf]
  %v480 = vld [vmem:[%s5 + $0x10] sm:$0xf]
  %v481 = vld [vmem:[%s5 + $0x1c] sm:$0xf]
  %v482 = vld [vmem:[%s5 + $0x28] sm:$0xf]
  %v487 = vunpack.c.l.b16 %v479
  %v488 = vunpack.c.l.b16 %v480
  %v489 = vunpack.c.l.b16 %v481
  %v490 = vunpack.c.l.b16 %v482
  %v491 = vpack.c.b16 %v488, %v487
  %v492 = vpack.c.b16 %v490, %v489
  %493 = vrot.lane.b32.xlu0 %v491, 96
  %v494 = vpop.permute.xlu0 %493
  %495 = vrot.lane.b32.xlu0 %v492, 96
  %v496 = vpop.permute.xlu0 %495
  %v500 = vsel %vm32, %v478, 0
  %502 = vmatpush.bf16.msra.mxu0 0
  %503 = vmatpush.bf16.msra.mxu0 0
  %504 = vmatpush.bf16.msra.mxu0 0
  %505 = vmatpush.bf16.msra.mxu0 0
  %506 = vmatpush.bf16.msra.mxu0 0
  %507 = vmatpush.bf16.msra.mxu0 0
  %508 = vmatpush.bf16.msra.mxu0 %v496
  %509 = vmatpush.bf16.msra.mxu0 %v494
  %510 = vmatmul.bf16.gmra.mxu0 %v500
  %v511 = vpop.f32.mrf.mxu0
  %v512 = vadd.f32 0.0, %v511
  %v513 = vpop.f32.mrf.mxu0
  %v514 = vadd.f32 0.0, %v513
  %515 = vdwg.mxu0
  %v516 = vadd.f32 %v27, %v512
  %v517 = vadd.f32 %v28, %v514
  %v518 = vld [vmem:[%s2 + $0x1] sm:$0x1]
  %v519 = vmul.f32 %v516, %v516
  %v520 = vmul.f32 %v517, %v517
  %v521 = vsel %vm32, %v519, 0.0
  %522 = vadd.xlane.f32.xlu0 %v521
  %v523 = vpop.xlane.xlu0 %522
  %v524 = vsel %vm32, %v520, 0.0
  %525 = vadd.xlane.f32.xlu0 %v524
  %v526 = vpop.xlane.xlu0 %525
  %v527 = vmul.f32 %v523, %v45
  %v528 = vmul.f32 %v526, %v45
  %v529 = vadd.f32 %v527, 1e-06
  %v530 = vadd.f32 %v528, 1e-06
  %v531 = vrsqrt.pop %v529
  %v532 = vmul.f32 %v531, %v529
  %v533 = vmul.f32 %v532, %v531
  %v534 = vmul.f32 0.5, %v533
  %v535 = vsub.f32 1.5, %v534
  %v536 = vmul.f32 %v531, %v535
  %vm537 = vweird.f32 %v529
  %vm538 = vweird.f32 %v531
  %vm539 = vmor %vm537, %vm538
  %v540 = vsel %vm539, %v531, %v536
  %v541 = vrsqrt.pop %v530
  %v542 = vmul.f32 %v541, %v530
  %v543 = vmul.f32 %v542, %v541
  %v544 = vmul.f32 0.5, %v543
  %v545 = vsub.f32 1.5, %v544
  %v546 = vmul.f32 %v541, %v545
  %vm547 = vweird.f32 %v530
  %vm548 = vweird.f32 %v541
  %vm549 = vmor %vm547, %vm548
  %v550 = vsel %vm549, %v541, %v546
  %v551 = vmul.f32 %v516, %v540
  %v552 = vmul.f32 %v517, %v550
  %v553 = vperm.slane %v518, 0
  %v554 = vmul.f32 %v553, %v551
  %v555 = vmul.f32 %v553, %v552
  %v556 = vpack.c.bf16 %v555, %v554
  %557 = vrot.lane.b32.xlu0 %v491, 64
  %v558 = vpop.permute.xlu0 %557
  %559 = vrot.lane.b32.xlu0 %v492, 64
  %v560 = vpop.permute.xlu0 %559
  %v564 = vsel %vm32, %v556, 0
  %566 = vmatpush.bf16.msra.mxu0 0
  %567 = vmatpush.bf16.msra.mxu0 0
  %568 = vmatpush.bf16.msra.mxu0 0
  %569 = vmatpush.bf16.msra.mxu0 0
  %570 = vmatpush.bf16.msra.mxu0 0
  %571 = vmatpush.bf16.msra.mxu0 0
  %572 = vmatpush.bf16.msra.mxu0 %v560
  %573 = vmatpush.bf16.msra.mxu0 %v558
  %574 = vmatmul.bf16.gmra.mxu0 %v564
  %v575 = vpop.f32.mrf.mxu0
  %v576 = vadd.f32 0.0, %v575
  %v577 = vpop.f32.mrf.mxu0
  %v578 = vadd.f32 0.0, %v577
  %579 = vdwg.mxu0
  %v580 = vld [vmem:[%s5 + $0x8] sm:$0xf]
  %v581 = vld [vmem:[%s5 + $0x14] sm:$0xf]
  %v582 = vld [vmem:[%s5 + $0x20] sm:$0xf]
  %v583 = vld [vmem:[%s5 + $0x2c] sm:$0xf]
  %v588 = vunpack.c.l.b16 %v580
  %v589 = vunpack.c.l.b16 %v581
  %v590 = vunpack.c.l.b16 %v582
  %v591 = vunpack.c.l.b16 %v583
  %v592 = vpack.c.b16 %v589, %v588
  %v593 = vpack.c.b16 %v591, %v590
  %596 = vmatpush.bf16.msra.mxu0 0
  %597 = vmatpush.bf16.msra.mxu0 0
  %598 = vmatpush.bf16.msra.mxu0 0
  %599 = vmatpush.bf16.msra.mxu0 0
  %600 = vmatpush.bf16.msra.mxu0 0
  %601 = vmatpush.bf16.msra.mxu0 0
  %602 = vmatpush.bf16.msra.mxu0 %v593
  %603 = vmatpush.bf16.msra.mxu0 %v592
  %604 = vmatmul.bf16.gmra.mxu0 %v564
  %v605 = vpop.f32.mrf.mxu0
  %v606 = vadd.f32 0.0, %v605
  %v607 = vpop.f32.mrf.mxu0
  %v608 = vadd.f32 0.0, %v607
  %609 = vdwg.mxu0
  %v610 = vxor.u32 %v576, 2147483648
  %v611 = vxor.u32 %v578, 2147483648
  %v612 = vmul.f32 %v610, 1.442695
  %v613 = vpow.pop %v612
  %v614 = vmul.f32 %v611, 1.442695
  %v615 = vpow.pop %v614
  %v616 = vadd.f32 %v613, 1.0
  %v617 = vadd.f32 %v615, 1.0
  %v618 = vrcp.pop %v616
  %v619 = vmul.f32 %v616, %v618
  %v620 = vsub.f32 1.0, %v619
  %v621 = vmul.f32 %v618, %v620
  %v622 = vadd.f32 %v618, %v621
  %vm623 = vweird.f32 %v616
  %vm624 = vweird.f32 %v618
  %vm625 = vmor %vm623, %vm624
  %v626 = vsel %vm625, %v618, %v622
  %v627 = vand.u32 2147483647, %v616
  %vm628 = vcmp.eq.f32.partialorder %v627, 8.507059e+37
  %v629 = vand.u32 %v616, 2147483648
  %v630 = vor.u32 1.1754944e-38, %v629
  %v631 = vsel %vm628, %v630, %v626
  %v632 = vmul.f32 1.0, %v631
  %v633 = vrcp.pop %v617
  %v634 = vmul.f32 %v617, %v633
  %v635 = vsub.f32 1.0, %v634
  %v636 = vmul.f32 %v633, %v635
  %v637 = vadd.f32 %v633, %v636
  %vm638 = vweird.f32 %v617
  %vm639 = vweird.f32 %v633
  %vm640 = vmor %vm638, %vm639
  %v641 = vsel %vm640, %v633, %v637
  %v642 = vand.u32 2147483647, %v617
  %vm643 = vcmp.eq.f32.partialorder %v642, 8.507059e+37
  %v644 = vand.u32 %v617, 2147483648
  %v645 = vor.u32 1.1754944e-38, %v644
  %v646 = vsel %vm643, %v645, %v641
  %v647 = vmul.f32 1.0, %v646
  %v648 = vmul.f32 %v576, %v632
  %v649 = vmul.f32 %v578, %v647
  %v650 = vmul.f32 %v648, %v606
  %v651 = vmul.f32 %v649, %v608
  %v652 = vpack.c.bf16 %v651, %v650
  %v653 = vld [vmem:[%s6] sm:$0xf]
  %v654 = vld [vmem:[%s6 + $0x4] sm:$0xf]
  %v655 = vld [vmem:[%s6 + $0x8] sm:$0xf]
  %v656 = vld [vmem:[%s6 + $0xc] sm:$0xf]
  %v657 = vld [vmem:[%s6 + $0x10] sm:$0xf]
  %v658 = vld [vmem:[%s6 + $0x14] sm:$0xf]
  %v659 = vld [vmem:[%s6 + $0x18] sm:$0xf]
  %v660 = vld [vmem:[%s6 + $0x1c] sm:$0xf]
  %v669 = vunpack.c.l.b16 %v653
  %v670 = vunpack.c.l.b16 %v654
  %v671 = vunpack.c.l.b16 %v655
  %v672 = vunpack.c.l.b16 %v656
  %v673 = vunpack.c.l.b16 %v657
  %v674 = vunpack.c.l.b16 %v658
  %v675 = vunpack.c.l.b16 %v659
  %v676 = vunpack.c.l.b16 %v660
  %v677 = vpack.c.b16 %v670, %v669
  %v678 = vpack.c.b16 %v672, %v671
  %v679 = vpack.c.b16 %v674, %v673
  %v680 = vpack.c.b16 %v676, %v675
  %v686 = vsel %vm383, %v652, 0
  %688 = vmatpush.bf16.msra.mxu0 0
  %689 = vmatpush.bf16.msra.mxu0 0
  %690 = vmatpush.bf16.msra.mxu0 0
  %691 = vmatpush.bf16.msra.mxu0 0
  %692 = vmatpush.bf16.msra.mxu0 %v680
  %693 = vmatpush.bf16.msra.mxu0 %v679
  %694 = vmatpush.bf16.msra.mxu0 %v678
  %695 = vmatpush.bf16.msra.mxu0 %v677
  %696 = vmatmul.bf16.gmra.mxu0 %v686
  %v697 = vpop.f32.mrf.mxu0
  %v698 = vadd.f32 0.0, %v697
  %v699 = vpop.f32.mrf.mxu0
  %v700 = vadd.f32 0.0, %v699
  %701 = vdwg.mxu0
  %v702 = vadd.f32 %v516, %v698
  %v703 = vadd.f32 %v517, %v700
  %704 = vst.msk [vmem:[%s7] sm:$0xff] %vm32, %v702
  %705 = vst.msk [vmem:[%s7 + $0x8] sm:$0xff] %vm32, %v703
  // Predicated region
  $region30: #{llama_decoder_layer.1} parent=0 // pred_check
    _
  $region31: #{llama_decoder_layer.1} parent=0 // pred_check_branch
    %707 = sbr.rel (0) target = $region33
  $region32: #{llama_decoder_layer.1} parent=0 // pred_region
    _
  $region33: #{llama_decoder_layer.1} parent=0 // pred_fallthru
    _
  // Predicated region
  $region34: #{llama_decoder_layer.1} parent=0 // pred_check
    _
  $region35: #{llama_decoder_layer.1} parent=0 // pred_check_branch
    %709 = sbr.rel (0) target = $region37
  $region36: #{llama_decoder_layer.1} parent=0 // pred_region
    _
  $region37: #{llama_decoder_layer.1} parent=0 // pred_fallthru
    _

</llo_original>
